<compile_context>
chip_gen: v7x
topology: tpu7x:2x2x1
jax: 0.10.0
libtpu: 0.0.40
codegen_flags: <defaults>
</compile_context>

<pallas_src>
import jax
import jax.numpy as jnp
from jax.experimental import pallas as pl
from jax.experimental.pallas import tpu as pltpu

TB_MAX = 8192   # max batch rows per tile (VMEM-bounded)
TB_MIN = 1024   # min batch rows per tile for large batches (per-step overhead)


def _round_up(n, m):
    return ((n + m - 1) // m) * m


def _regressor_kernel(x_ref, w1_ref, b1_ref, w2_ref, b2_ref, o_ref):
    # x_ref : VMEM [TB, L]   (natural layout, batch on sublanes)
    # w1_ref: VMEM [L, H]
    # b1_ref: VMEM [1, H]
    # w2_ref: VMEM [1, H]    (layer2 weight, transposed to a row)
    # b2_ref: VMEM [1, 1]
    # o_ref : VMEM [TB, 1]
    h = jnp.dot(x_ref[...], w1_ref[...], preferred_element_type=jnp.float32)  # MXU
    h = jnp.maximum(h + b1_ref[...], 0.0)                                     # [TB, H]
    o = jnp.sum(h * w2_ref[...], axis=-1, keepdims=True) + b2_ref[...]        # [TB, 1]
    o_ref[...] = o.astype(o_ref.dtype)


def regressor_forward(x, w1, b1, w2, b2, dropout=0.0, tile_rows=None,
                      min_pallas_batch=1024):
    """x: [B, length] (or [length]). w1: [length, hid], b1: [hid], w2: [hid, 1], b2: [1].

    Returns the same thing as the PyTorch module: [B] for B > 1, scalar for B == 1.
    """
    # TODO(synk): dropout only supported for p == 0 (identity), matching the
    # default call path of the reference module.
    assert dropout == 0.0

    if x.ndim == 1:
        x = x[None, :]
    B, length = x.shape
    hid = w1.shape[1]

    x = x.astype(jnp.float32)
    w1_f = jnp.asarray(w1, jnp.float32).reshape(length, hid)
    b1_f = jnp.asarray(b1, jnp.float32).reshape(1, hid)
    w2_row = jnp.asarray(w2, jnp.float32).reshape(1, hid)   # [hid,1] -> [1,hid]
    b2_f = jnp.asarray(b2, jnp.float32).reshape(1, 1)

    # Small-batch fallback: launch + layout plumbing dominates; fused XLA is cheaper.
    # (B < 8 always takes this path so every Pallas block stays sublane-aligned.)
    if B < 8 or B < min_pallas_batch:
        y = jnp.maximum(x @ w1_f + b1_f, 0.0) @ w2_row.T + b2_f      # [B, 1]
        return jnp.squeeze(y)

    # ---- tile-size selection ----
    if tile_rows is None:
        tb = _round_up(pl.cdiv(B, 4), 8)        # aim for >= 4 grid steps
        tb = max(TB_MIN, min(TB_MAX, tb))
    else:
        tb = max(8, _round_up(tile_rows, 8))
    tb = min(tb, _round_up(B, 8))               # never larger than needed
    grid = (pl.cdiv(B, tb),)

    # VMEM: x block (tb, 20) and out block (tb, 1) each occupy tb*512 B (lane-padded),
    # double-buffered -> ~4*tb*512 B, plus tiny weights + headroom.
    vmem_bytes = int(min(4 * tb * 512 + (2 << 20), 48 << 20))

    out2d = pl.pallas_call(
        _regressor_kernel,
        out_shape=jax.ShapeDtypeStruct((B, 1), jnp.float32),
        grid=grid,
        in_specs=[
            pl.BlockSpec((tb, length), lambda i: (i, 0)),   # x tile (ragged tail OK)
            pl.BlockSpec((length, hid), lambda i: (0, 0)),  # W1 (VMEM-resident)
            pl.BlockSpec((1, hid), lambda i: (0, 0)),       # b1
            pl.BlockSpec((1, hid), lambda i: (0, 0)),       # w2 row
            pl.BlockSpec((1, 1), lambda i: (0, 0)),         # b2
        ],
        out_specs=pl.BlockSpec((tb, 1), lambda i: (i, 0)),
        compiler_params=pltpu.CompilerParams(
            dimension_semantics=("parallel",),   # shard batch tiles across TCs
            vmem_limit_bytes=vmem_bytes,
        ),
    )(x, w1_f, b1_f, w2_row, b2_f)

    # PyTorch .squeeze(): [B] for B > 1, scalar for B == 1
    return jnp.squeeze(out2d)


def init_params(key, K):
    """Deterministic init mimicking nn.Linear's U(-1/sqrt(fan_in), 1/sqrt(fan_in))."""
    length = K * (K + 1)
    hid = 2
    k1, k2, k3, k4 = jax.random.split(key, 4)
    bound1 = 1.0 / jnp.sqrt(length)
    bound2 = 1.0 / jnp.sqrt(hid)
    w1 = jax.random.uniform(k1, (length, hid), jnp.float32, -bound1, bound1)
    b1 = jax.random.uniform(k2, (hid,), jnp.float32, -bound1, bound1)
    w2 = jax.random.uniform(k3, (hid, 1), jnp.float32, -bound2, bound2)
    b2 = jax.random.uniform(k4, (1,), jnp.float32, -bound2, bound2)
    return w1, b1, w2, b2


if __name__ == "__main__":
    K = 4                          # length = K*(K+1) = 20
    length = K * (K + 1)

    key = jax.random.PRNGKey(0)
    kx1, kx2, kp = jax.random.split(key, 3)
    w1, b1, w2, b2 = init_params(kp, K)

    def ref_fn(x):
        return jnp.squeeze(jnp.maximum(x @ w1 + b1, 0.0) @ w2 + b2)

    # Test 1: small batch, forced through the Pallas kernel (grid=(1,))
    B1 = 8
    x1 = jax.random.normal(kx1, (B1, length), jnp.float32)
    y1 = regressor_forward(x1, w1, b1, w2, b2, min_pallas_batch=0)
    jax.block_until_ready(y1)
    assert y1.shape == (B1,), y1.shape
    assert jnp.allclose(y1, ref_fn(x1), atol=1e-4, rtol=1e-5)

    # Test 2: larger batch exercising the multi-step grid with a ragged last block
    # (B=2000, tile=512 -> grid=(4,), last block covers only 464 valid rows).
    B2 = 2000
    x2 = jax.random.normal(kx2, (B2, length), jnp.float32)
    y2 = regressor_forward(x2, w1, b1, w2, b2, min_pallas_batch=0, tile_rows=512)
    jax.block_until_ready(y2)
    assert y2.shape == (B2,), y2.shape
    assert jnp.allclose(y2, ref_fn(x2), atol=1e-4, rtol=1e-5)

    # Test 3: B == 1 goes through the jnp fallback; .squeeze() -> scalar like PyTorch
    x3 = jax.random.normal(kx1, (1, length), jnp.float32)
    y3 = regressor_forward(x3, w1, b1, w2, b2)
    jax.block_until_ready(y3)
    assert y3.shape == (), y3.shape
    assert jnp.allclose(y3, ref_fn(x3), atol=1e-4, rtol=1e-5)

    print("KERNEL_OK")
</pallas_src>

<mosaic_0001>
module attributes {stable_mosaic.version = 11 : i64} {
  func.func @_regressor_kernel(%arg0: i32, %arg1: memref<8x20xf32, #tpu.memory_space<vmem>>, %arg2: memref<20x2xf32, #tpu.memory_space<vmem>>, %arg3: memref<1x2xf32, #tpu.memory_space<vmem>>, %arg4: memref<1x2xf32, #tpu.memory_space<vmem>>, %arg5: memref<1x1xf32, #tpu.memory_space<vmem>>, %arg6: memref<8x1xf32, #tpu.memory_space<vmem>>) attributes {dimension_semantics = [#tpu.dimension_semantics<parallel>], iteration_bounds = array<i64: 1>, scalar_prefetch = 0 : i64, scratch_operands = 0 : i64, tpu.core_type = #tpu.core_type<tc>, window_params = [{transform_indices = @transform_0, window_bounds = array<i64: 8, 20>}, {pipeline_mode = #tpu.pipeline_mode<synchronous>, transform_indices = @transform_1, window_bounds = array<i64: 20, 2>}, {pipeline_mode = #tpu.pipeline_mode<synchronous>, transform_indices = @transform_2, window_bounds = array<i64: 1, 2>}, {pipeline_mode = #tpu.pipeline_mode<synchronous>, transform_indices = @transform_3, window_bounds = array<i64: 1, 2>}, {pipeline_mode = #tpu.pipeline_mode<synchronous>, transform_indices = @transform_4, window_bounds = array<i64: 1, 1>}, {transform_indices = @transform_5, window_bounds = array<i64: 8, 1>}]} {
    %c0 = arith.constant 0 : index
    %c0_0 = arith.constant 0 : index
    %0 = vector.load %arg1[%c0, %c0_0] : memref<8x20xf32, #tpu.memory_space<vmem>>, vector<8x20xf32>
    %c0_1 = arith.constant 0 : index
    %c0_2 = arith.constant 0 : index
    %1 = vector.load %arg2[%c0_1, %c0_2] : memref<20x2xf32, #tpu.memory_space<vmem>>, vector<20x2xf32>
    %cst = arith.constant dense<0.000000e+00> : vector<8x2xf32>
    %2 = tpu.matmul %0, %1, %cst {dimension_numbers = #tpu.dot_dimension_numbers<[1], [0], [0], [1], [0, 0, 1, 1], [], []>} : vector<8x20xf32>, vector<20x2xf32>, vector<8x2xf32> -> vector<8x2xf32>
    %c0_3 = arith.constant 0 : index
    %c0_4 = arith.constant 0 : index
    %3 = vector.load %arg3[%c0_3, %c0_4] : memref<1x2xf32, #tpu.memory_space<vmem>>, vector<1x2xf32>
    %4 = vector.broadcast %3 : vector<1x2xf32> to vector<8x2xf32>
    %5 = arith.addf %2, %4 : vector<8x2xf32>
    %cst_5 = arith.constant 0.000000e+00 : f32
    %6 = vector.broadcast %cst_5 : f32 to vector<8x2xf32>
    %7 = arith.maximumf %5, %6 : vector<8x2xf32>
    %c0_6 = arith.constant 0 : index
    %c0_7 = arith.constant 0 : index
    %8 = vector.load %arg4[%c0_6, %c0_7] : memref<1x2xf32, #tpu.memory_space<vmem>>, vector<1x2xf32>
    %9 = vector.broadcast %8 : vector<1x2xf32> to vector<8x2xf32>
    %10 = arith.mulf %7, %9 : vector<8x2xf32>
    %cst_8 = arith.constant dense<0.000000e+00> : vector<8xf32>
    %11 = vector.multi_reduction <add>, %10, %cst_8 [1] : vector<8x2xf32> to vector<8xf32>
    %12 = vector.shape_cast %11 : vector<8xf32> to vector<8x1xf32>
    %c0_9 = arith.constant 0 : index
    %c0_10 = arith.constant 0 : index
    %13 = vector.load %arg5[%c0_9, %c0_10] : memref<1x1xf32, #tpu.memory_space<vmem>>, vector<1x1xf32>
    %14 = vector.broadcast %13 : vector<1x1xf32> to vector<8x1xf32>
    %15 = arith.addf %12, %14 : vector<8x1xf32>
    %c0_11 = arith.constant 0 : index
    %c0_12 = arith.constant 0 : index
    %16 = vector.load %arg6[%c0_11, %c0_12] : memref<8x1xf32, #tpu.memory_space<vmem>>, vector<8x1xf32>
    tpu.vector_store %arg6[%c0_11, %c0_12], %15 {strides = array<i32>} : memref<8x1xf32, #tpu.memory_space<vmem>>, vector<8x1xf32>,
    return
  }
  func.func @transform_0(%arg0: i32) -> (i32, i32) {
    %c0_i32 = arith.constant 0 : i32
    %c0_i32_0 = arith.constant 0 : i32
    return %arg0, %c0_i32 : i32, i32
  }
  func.func @transform_1(%arg0: i32) -> (i32, i32) {
    %c0_i32 = arith.constant 0 : i32
    %c0_i32_0 = arith.constant 0 : i32
    %c0_i32_1 = arith.constant 0 : i32
    return %c0_i32, %c0_i32_0 : i32, i32
  }
  func.func @transform_2(%arg0: i32) -> (i32, i32) {
    %c0_i32 = arith.constant 0 : i32
    %c0_i32_0 = arith.constant 0 : i32
    %c0_i32_1 = arith.constant 0 : i32
    return %c0_i32, %c0_i32_0 : i32, i32
  }
  func.func @transform_3(%arg0: i32) -> (i32, i32) {
    %c0_i32 = arith.constant 0 : i32
    %c0_i32_0 = arith.constant 0 : i32
    %c0_i32_1 = arith.constant 0 : i32
    return %c0_i32, %c0_i32_0 : i32, i32
  }
  func.func @transform_4(%arg0: i32) -> (i32, i32) {
    %c0_i32 = arith.constant 0 : i32
    %c0_i32_0 = arith.constant 0 : i32
    %c0_i32_1 = arith.constant 0 : i32
    return %c0_i32, %c0_i32_0 : i32, i32
  }
  func.func @transform_5(%arg0: i32) -> (i32, i32) {
    %c0_i32 = arith.constant 0 : i32
    %c0_i32_0 = arith.constant 0 : i32
    return %arg0, %c0_i32 : i32, i32
  }
}

</mosaic_0001>

<llo_original>
// kernel: tpu_custom_call.1
$region0: #{tpu_custom_call.1}
  #allocation0 [shape = 'u32[]', space=smem, size = 0x4, offset = 0x4, fixed_abs, tag = 'smem constant byte address 0x4 - core index']
  #allocation1 [shape = 'u32[144,128]{1,0:T(1,128)}', space=vmem, size = 0x12000, scoped, tag = 'internal scratch']
  #allocation2 [shape = 'f32[1,1]{1,0:T(1,128)S(1)}', space=vmem, size = 0x200, scoped, tag = 'scoped memory for tpu_custom_call.1']
  %s0 = inlined_call_operand.vmem [shape: f32[8,20], index: 0, kind: input, shape index: {}]
  %s1 = inlined_call_operand.vmem [shape: f32[20,2], index: 1, kind: input, shape index: {}]
  %s2 = inlined_call_operand.vmem [shape: f32[1,2], index: 2, kind: input, shape index: {}]
  %s3 = inlined_call_operand.vmem [shape: f32[1,2], index: 3, kind: input, shape index: {}]
  %s4 = inlined_call_operand.<no memory space> [shape: f32[1,1], index: 4, kind: input, shape index: {}]
  %s5 = inlined_call_operand.vmem [shape: f32[8,1], index: 5, kind: output, shape index: {}]
  %s6 = sld [smem:[#allocation0]]
  $region30: #{tpu_custom_call.1} parent=0
    _
  %s8 = ssub.s32 1, %s6
  %s9 = scalar_select 0, %s8, %s6
  %v10 = vstv %s4
  %11 = vst [vmem:[#allocation2] sm:$0x1] %v10
  // Predicated region
  $region2: #{tpu_custom_call.1} parent=0 // pred_check
    _
  $region3: #{tpu_custom_call.1} parent=0 // pred_check_branch
    %13 = sbr.rel (0) target = $region5
  $region4: #{tpu_custom_call.1} parent=0 // pred_region
    _
  $region5: #{tpu_custom_call.1} parent=0 // pred_fallthru
    _
  // Predicated region
  $region6: #{tpu_custom_call.1} parent=0 // pred_check
    _
  $region7: #{tpu_custom_call.1} parent=0 // pred_check_branch
    %15 = sbr.rel (0) target = $region9
  $region8: #{tpu_custom_call.1} parent=0 // pred_region
    _
  $region9: #{tpu_custom_call.1} parent=0 // pred_fallthru
    _
  // Predicated region
  $region10: #{tpu_custom_call.1} parent=0 // pred_check
    _
  $region11: #{tpu_custom_call.1} parent=0 // pred_check_branch
    %17 = sbr.rel (0) target = $region13
  $region12: #{tpu_custom_call.1} parent=0 // pred_region
    _
  $region13: #{tpu_custom_call.1} parent=0 // pred_fallthru
    _
  // Predicated region
  $region14: #{tpu_custom_call.1} parent=0 // pred_check
    _
  $region15: #{tpu_custom_call.1} parent=0 // pred_check_branch
    %19 = sbr.rel (0) target = $region17
  $region16: #{tpu_custom_call.1} parent=0 // pred_region
    _
  $region17: #{tpu_custom_call.1} parent=0 // pred_fallthru
    _
  // Predicated region
  $region18: #{tpu_custom_call.1} parent=0 // pred_check
    _
  $region19: #{tpu_custom_call.1} parent=0 // pred_check_branch
    %21 = sbr.rel (0) target = $region21
  $region20: #{tpu_custom_call.1} parent=0 // pred_region
    _
  $region21: #{tpu_custom_call.1} parent=0 // pred_fallthru
    _
  %v22 = vld [vmem:[%s0] sm:$0xff]
  %v23 = vld [vmem:[%s1] sm:$0xff]
  %v24 = vld [vmem:[%s1 + $0x8] sm:$0xff]
  %v25 = vld [vmem:[%s1 + $0x10] sm:$0xf]
  %v26 = vld [vmem:[%s2] sm:$0x1]
  %v28 = vlaneseq
  %v29 = vshrl.u32 %v28, 7
  %v30 = vsub.s32 0, %v29
  %v31 = vrot.slane %v26, %v30
  %vm33 = vcmask 162816
  %v35 = vsel %vm33, %v22, 0
  %vm37 = vcmask 1043456
  %v39 = vsel %vm37, %v25, 0
  %41 = vmatprep.subr.mxu0 0.0
  %42 = vmatpush1.msra.mxu0 %v23
  %43 = vmatprep.subr.mxu0 0.0
  %44 = vmatpush1.msra.mxu0 %v24
  %45 = vmatprep.subr.mxu0 0.0
  %46 = vmatpush1.msra.mxu0 %v39
  %47 = vmatprep.subr.mxu0 0.0
  %48 = vmatpush1.msra.mxu0 0.0
  %49 = vmatprep.subr.mxu0 0.0
  %50 = vmatpush1.msra.mxu0 0.0
  %51 = vmatprep.subr.mxu0 0.0
  %52 = vmatpush1.msra.mxu0 0.0
  %53 = vmatprep.subr.mxu0 0.0
  %54 = vmatpush1.msra.mxu0 0.0
  %55 = vmatprep.subr.mxu0 0.0
  %56 = vmatpush1.msra.mxu0 0.0
  %57 = vmatprep.subr.mxu0 0.0
  %58 = vmatpush1.msra.mxu0 0.0
  %59 = vmatprep.subr.mxu0 0.0
  %60 = vmatpush1.msra.mxu0 0.0
  %61 = vmatprep.subr.mxu0 0.0
  %62 = vmatpush1.msra.mxu0 0.0
  %63 = vmatprep.subr.mxu0 0.0
  %64 = vmatpush1.msra.mxu0 0.0
  %65 = vmatprep.subr.mxu0 0.0
  %66 = vmatpush1.msra.mxu0 0.0
  %67 = vmatprep.subr.mxu0 0.0
  %68 = vmatpush1.msra.mxu0 0.0
  %69 = vmatprep.subr.mxu0 0.0
  %70 = vmatpush1.msra.mxu0 0.0
  %71 = vmatprep.subr.mxu0 0.0
  %72 = vmatpush1.msra.mxu0 0.0
  %73 = vmatprep.subr.mxu0 0.0
  %74 = vmatpush1.msra.mxu0 0.0
  %75 = vmatprep.subr.mxu0 0.0
  %76 = vmatpush1.msra.mxu0 0.0
  %77 = vmatprep.subr.mxu0 0.0
  %78 = vmatpush1.msra.mxu0 0.0
  %79 = vmatprep.subr.mxu0 0.0
  %80 = vmatpush1.msra.mxu0 0.0
  %81 = vmatprep.subr.mxu0 0.0
  %82 = vmatpush1.msra.mxu0 0.0
  %83 = vmatprep.subr.mxu0 0.0
  %84 = vmatpush1.msra.mxu0 0.0
  %85 = vmatprep.subr.mxu0 0.0
  %86 = vmatpush1.msra.mxu0 0.0
  %87 = vmatprep.subr.mxu0 0.0
  %88 = vmatpush1.msra.mxu0 0.0
  %89 = vmatprep.subr.mxu0 0.0
  %90 = vmatpush1.msra.mxu0 0.0
  %91 = vmatprep.subr.mxu0 0.0
  %92 = vmatpush1.msra.mxu0 0.0
  %93 = vmatprep.subr.mxu0 0.0
  %94 = vmatpush1.msra.mxu0 0.0
  %95 = vmatprep.subr.mxu0 0.0
  %96 = vmatpush1.msra.mxu0 0.0
  %97 = vmatprep.subr.mxu0 0.0
  %98 = vmatpush1.msra.mxu0 0.0
  %99 = vmatprep.subr.mxu0 0.0
  %100 = vmatpush1.msra.mxu0 0.0
  %101 = vmatprep.subr.mxu0 0.0
  %102 = vmatpush1.msra.mxu0 0.0
  %103 = vmatprep.subr.mxu0 0.0
  %104 = vmatpush1.msra.mxu0 0.0
  %105 = vmatprep.mubr.f32.mxu0 0.0
  %106 = vmatmul.mubr.f32.gmra.mrb[0].mxu0 %v35
  %v107 = vpop.f32.mrb[0].mxu0
  %v108 = vadd.f32 %v31, %v107
  %v109 = vpop.f32.mrb[0].mxu0
  %110 = vdwg.mxu0
  %v111 = vmax.f32 %v108, 0.0
  %v112 = vld [vmem:[%s3] sm:$0x1]
  %v114 = vlaneseq
  %v115 = vshrl.u32 %v114, 7
  %v116 = vsub.s32 0, %v115
  %v117 = vrot.slane %v112, %v116
  %v119 = vmul.f32 %v111, %v117
  %vm120 = vcmask 15360
  %v121 = vsel %vm120, %v119, 0.0
  %122 = vadd.xlane.f32.xlu0 %v121
  %v123 = vpop.xlane.xlu0 %122
  %v124 = vld [vmem:[#allocation2] sm:$0x1]
  %v126 = vlaneseq
  %v127 = vshrl.u32 %v126, 7
  %v128 = vsub.s32 0, %v127
  %v129 = vrot.slane %v124, %v128
  %v131 = vadd.f32 %v123, %v129
  %vm132 = vcmask 7168
  %133 = vst.msk [vmem:[%s5] sm:$0xff] %vm132, %v131
  // Predicated region
  $region22: #{tpu_custom_call.1} parent=0 // pred_check
    _
  $region23: #{tpu_custom_call.1} parent=0 // pred_check_branch
    %135 = sbr.rel (0) target = $region25
  $region24: #{tpu_custom_call.1} parent=0 // pred_region
    _
  $region25: #{tpu_custom_call.1} parent=0 // pred_fallthru
    _
  // Predicated region
  $region26: #{tpu_custom_call.1} parent=0 // pred_check
    _
  $region27: #{tpu_custom_call.1} parent=0 // pred_check_branch
    %137 = sbr.rel (0) target = $region29
  $region28: #{tpu_custom_call.1} parent=0 // pred_region
    _
  $region29: #{tpu_custom_call.1} parent=0 // pred_fallthru
    _

</llo_original>
